<compile_context>
chip_gen: v7x
topology: tpu7x:2x2x1
jax: 0.10.0
libtpu: 0.0.40
codegen_flags: <defaults>
</compile_context>

<pallas_src>
import functools

import jax
import jax.numpy as jnp
from jax.experimental import pallas as pl
from jax.experimental.pallas import tpu as pltpu

LANE = 128       # TPU lane width (last dim)
SUBLANE = 8      # f32 sublane count (second-to-last dim)
NEG_BIG = -1e30  # finite "-inf" for vocab padding / running-max init


def _round_up(x, m):
    return (x + m - 1) // m * m


def decoder_step_kernel(x_ref, h_ref, wih_ref, whh_ref, bih_ref, bhh_ref,
                        wout_ref, bout_ref, out_ref, hout_ref,
                        h_sc, m_sc, l_sc):
    """Grid axis 0 runs over vocab tiles. GRU runs once on step 0; every step
    does one V-tile of the output projection + online log-softmax stats."""
    Hp = h_ref.shape[-1]
    j = pl.program_id(0)

    # ---- step 0: ReLU + single-step GRU (inputs/weights stay resident) ----
    @pl.when(j == 0)
    def _():
        x = jnp.maximum(x_ref[...], 0.0)          # F.relu(embedded)
        h = h_ref[...]
        gi = jnp.dot(x.astype(jnp.bfloat16), wih_ref[...],
                     preferred_element_type=jnp.float32) + bih_ref[...]
        gh = jnp.dot(h.astype(jnp.bfloat16), whh_ref[...],
                     preferred_element_type=jnp.float32) + bhh_ref[...]
        # Gate order r|z|n; Hp % 128 == 0 so every slice is lane-aligned.
        i_r, i_z, i_n = gi[:, 0:Hp], gi[:, Hp:2 * Hp], gi[:, 2 * Hp:3 * Hp]
        h_r, h_z, h_n = gh[:, 0:Hp], gh[:, Hp:2 * Hp], gh[:, 2 * Hp:3 * Hp]
        r = 0.5 * (jnp.tanh(0.5 * (i_r + h_r)) + 1.0)   # sigmoid via tanh
        z = 0.5 * (jnp.tanh(0.5 * (i_z + h_z)) + 1.0)
        n = jnp.tanh(i_n + r * h_n)
        h_new = (1.0 - z) * n + z * h
        h_sc[...] = h_new
        hout_ref[...] = h_new
        m_sc[...] = jnp.full_like(m_sc, NEG_BIG)
        l_sc[...] = jnp.zeros_like(l_sc)

    # ---- per-V-tile output projection + online log-softmax stats ----------
    logits = jnp.dot(h_sc[...].astype(jnp.bfloat16), wout_ref[...],
                     preferred_element_type=jnp.float32) + bout_ref[...]
    out_ref[j] = logits                           # unnormalized for now

    m_prev = m_sc[...]
    m_new = jnp.maximum(m_prev, jnp.max(logits, axis=-1, keepdims=True))
    l_sc[...] = (l_sc[...] * jnp.exp(m_prev - m_new)
                 + jnp.sum(jnp.exp(logits - m_new), axis=-1, keepdims=True))
    m_sc[...] = m_new

    # ---- finalize: subtract log-sum-exp from the resident output block ----
    @pl.when(j == pl.num_programs(0) - 1)
    def _():
        lse = m_sc[...] + jnp.log(l_sc[...])      # [Bp, 1]
        out_ref[...] = out_ref[...] - lse[None, :, :]


def prepare_decoder_params(params):
    """One-time prep (outside the jitted decode step): pad to (8,128) tiles,
    pre-transpose, cast matmul weights to bf16 (biases stay f32)."""
    V, H = params["emb"].shape
    Hp = _round_up(H, LANE)
    v128 = _round_up(V, LANE)
    tile_v = v128 if v128 <= 512 else 512
    Vp = _round_up(v128, tile_v)

    def gate_weight_t(w):   # [3H, H] (r|z|n stacked) -> padded transpose [Hp, 3Hp]
        w3 = w.reshape(3, H, H)                        # [gate, out, in]
        w3 = jnp.transpose(w3, (0, 2, 1))              # [gate, in, out]
        w3 = jnp.pad(w3, ((0, 0), (0, Hp - H), (0, Hp - H)))
        return jnp.transpose(w3, (1, 0, 2)).reshape(Hp, 3 * Hp)

    def gate_bias(b):       # [3H] -> [1, 3Hp]
        return jnp.pad(b.reshape(3, H), ((0, 0), (0, Hp - H))).reshape(1, 3 * Hp)

    w_out_t = jnp.pad(params["w_out"].T, ((0, Hp - H), (0, Vp - V)))
    b_out = jnp.pad(params["b_out"], (0, Vp - V), constant_values=NEG_BIG)

    prep = {
        "emb": params["emb"].astype(jnp.float32),
        "w_ih_t": gate_weight_t(params["w_ih"]).astype(jnp.bfloat16),
        "w_hh_t": gate_weight_t(params["w_hh"]).astype(jnp.bfloat16),
        "b_ih": gate_bias(params["b_ih"]).astype(jnp.float32),
        "b_hh": gate_bias(params["b_hh"]).astype(jnp.float32),
        "w_out_t": w_out_t.astype(jnp.bfloat16),
        "b_out": b_out.reshape(1, Vp).astype(jnp.float32),
    }
    meta = {"hidden_size": H, "vocab_size": V, "tile_v": tile_v}
    return prep, meta


def decoder_rnn_forward(token_ids, hidden, prep, *, hidden_size, vocab_size,
                        tile_v):
    """
    token_ids: int32 [B, 1]
    hidden:    float32 [1, B, H]
    returns (log_probs [B, 1, V], hidden [1, B, H])
    """
    B = token_ids.shape[0]
    H, V = hidden_size, vocab_size
    Hp = prep["w_ih_t"].shape[0]
    Vp = prep["w_out_t"].shape[1]
    Bp = _round_up(max(B, SUBLANE), SUBLANE)
    nv = Vp // tile_v

    # Embedding gather (plain JAX glue), then pad to (sublane, lane) alignment.
    x = jnp.take(prep["emb"], token_ids[:, 0], axis=0)            # [B, H]
    x = jnp.pad(x, ((0, Bp - B), (0, Hp - H)))
    h0 = jnp.pad(hidden[0].astype(jnp.float32), ((0, Bp - B), (0, Hp - H)))

    def resident(shape):
        return pl.BlockSpec(shape, lambda j: (0,) * len(shape))

    grid_spec = pltpu.PrefetchScalarGridSpec(
        num_scalar_prefetch=0,
        grid=(nv,),
        in_specs=[
            resident((Bp, Hp)),                              # x_emb
            resident((Bp, Hp)),                              # h0
            resident((Hp, 3 * Hp)),                          # w_ih_t (bf16)
            resident((Hp, 3 * Hp)),                          # w_hh_t (bf16)
            resident((1, 3 * Hp)),                           # b_ih
            resident((1, 3 * Hp)),                           # b_hh
            pl.BlockSpec((Hp, tile_v), lambda j: (0, j)),    # w_out_t tile (bf16)
            pl.BlockSpec((1, tile_v), lambda j: (0, j)),     # b_out tile
        ],
        out_specs=(
            resident((nv, Bp, tile_v)),                      # log-probs (resident)
            resident((Bp, Hp)),                              # new hidden
        ),
        scratch_shapes=[
            pltpu.VMEM((Bp, Hp), jnp.float32),               # h_new
            pltpu.VMEM((Bp, 1), jnp.float32),                # running max
            pltpu.VMEM((Bp, 1), jnp.float32),                # running sum-exp
        ],
    )

    log_probs_p, h_new_p = pl.pallas_call(
        decoder_step_kernel,
        out_shape=(jax.ShapeDtypeStruct((nv, Bp, tile_v), jnp.float32),
                   jax.ShapeDtypeStruct((Bp, Hp), jnp.float32)),
        grid_spec=grid_spec,
        compiler_params=pltpu.CompilerParams(
            dimension_semantics=("arbitrary",),   # V axis carries running stats
            vmem_limit_bytes=48 * 1024 * 1024),
    )(x, h0, prep["w_ih_t"], prep["w_hh_t"], prep["b_ih"], prep["b_hh"],
      prep["w_out_t"], prep["b_out"])

    # [nv, Bp, tile_v] -> [Bp, Vp], then strip padding (tiny glue reshape).
    log_probs_full = jnp.transpose(log_probs_p, (1, 0, 2)).reshape(Bp, Vp)
    log_probs = log_probs_full[:B, :V][:, None, :]                # [B, 1, V]
    h_new = h_new_p[:B, :H][None, :, :]                           # [1, B, H]
    return log_probs, h_new


def init_params(key, hidden_size, output_voc_size):
    ks = jax.random.split(key, 7)
    bound = 1.0 / jnp.sqrt(hidden_size)
    return {
        # nn.Embedding: N(0, 1)
        "emb": jax.random.normal(ks[0], (output_voc_size, hidden_size), jnp.float32),
        # nn.GRU weights/biases: U(-1/sqrt(H), 1/sqrt(H)), gate order r|z|n
        "w_ih": jax.random.uniform(ks[1], (3 * hidden_size, hidden_size), jnp.float32, -bound, bound),
        "w_hh": jax.random.uniform(ks[2], (3 * hidden_size, hidden_size), jnp.float32, -bound, bound),
        "b_ih": jax.random.uniform(ks[3], (3 * hidden_size,), jnp.float32, -bound, bound),
        "b_hh": jax.random.uniform(ks[4], (3 * hidden_size,), jnp.float32, -bound, bound),
        # nn.Linear: U(-1/sqrt(H), 1/sqrt(H))
        "w_out": jax.random.uniform(ks[5], (output_voc_size, hidden_size), jnp.float32, -bound, bound),
        "b_out": jax.random.uniform(ks[6], (output_voc_size,), jnp.float32, -bound, bound),
    }


def reference_forward(token_ids, hidden, params):
    """Pure-JAX f32 reference matching the PyTorch module."""
    x = jnp.maximum(jnp.take(params["emb"], token_ids[:, 0], axis=0), 0.0)
    h = hidden[0]
    gi = x @ params["w_ih"].T + params["b_ih"]
    gh = h @ params["w_hh"].T + params["b_hh"]
    i_r, i_z, i_n = jnp.split(gi, 3, axis=-1)
    h_r, h_z, h_n = jnp.split(gh, 3, axis=-1)
    r = jax.nn.sigmoid(i_r + h_r)
    z = jax.nn.sigmoid(i_z + h_z)
    n = jnp.tanh(i_n + r * h_n)
    h_new = (1.0 - z) * n + z * h
    logits = h_new @ params["w_out"].T + params["b_out"]
    return jax.nn.log_softmax(logits, axis=-1)[:, None, :], h_new[None]


if __name__ == "__main__":
    B, H, V = 2, 32, 128

    key = jax.random.PRNGKey(0)
    k_param, k_tok, k_hid = jax.random.split(key, 3)

    params = init_params(k_param, H, V)
    token_ids = jax.random.randint(k_tok, (B, 1), 0, V, dtype=jnp.int32)
    hidden = jax.random.normal(k_hid, (1, B, H), jnp.float32)

    prep, meta = prepare_decoder_params(params)
    step_fn = jax.jit(functools.partial(
        decoder_rnn_forward,
        hidden_size=meta["hidden_size"],
        vocab_size=meta["vocab_size"],
        tile_v=meta["tile_v"]))

    log_probs, new_hidden = step_fn(token_ids, hidden, prep)
    jax.block_until_ready((log_probs, new_hidden))

    assert log_probs.shape == (B, 1, V)
    assert new_hidden.shape == (1, B, H)
    # log-softmax rows must sum to ~1 in probability space
    assert jnp.allclose(jnp.sum(jnp.exp(log_probs), axis=-1), 1.0, atol=1e-4)

    # Loose comparison vs. the f32 reference (weights are bf16 in the kernel).
    ref_lp, ref_h = reference_forward(token_ids, hidden, params)
    assert float(jnp.max(jnp.abs(log_probs - ref_lp))) < 0.35
    assert float(jnp.max(jnp.abs(new_hidden - ref_h))) < 0.15

    print("KERNEL_OK")
</pallas_src>

<mosaic_0001>
module attributes {stable_mosaic.version = 11 : i64} {
  func.func @decoder_step_kernel(%arg0: i32, %arg1: memref<8x128xf32, #tpu.memory_space<vmem>>, %arg2: memref<8x128xf32, #tpu.memory_space<vmem>>, %arg3: memref<128x384xbf16, #tpu.memory_space<vmem>>, %arg4: memref<128x384xbf16, #tpu.memory_space<vmem>>, %arg5: memref<1x384xf32, #tpu.memory_space<vmem>>, %arg6: memref<1x384xf32, #tpu.memory_space<vmem>>, %arg7: memref<128x128xbf16, #tpu.memory_space<vmem>>, %arg8: memref<1x128xf32, #tpu.memory_space<vmem>>, %arg9: memref<1x8x128xf32, #tpu.memory_space<vmem>>, %arg10: memref<8x128xf32, #tpu.memory_space<vmem>>, %arg11: memref<8x128xf32, #tpu.memory_space<vmem>>, %arg12: memref<8x1xf32, #tpu.memory_space<vmem>>, %arg13: memref<8x1xf32, #tpu.memory_space<vmem>>) attributes {dimension_semantics = [#tpu.dimension_semantics<arbitrary>], iteration_bounds = array<i64: 1>, scalar_prefetch = 0 : i64, scratch_operands = 3 : i64, tpu.core_type = #tpu.core_type<tc>, window_params = [{pipeline_mode = #tpu.pipeline_mode<synchronous>, transform_indices = @transform_0, window_bounds = array<i64: 8, 128>}, {pipeline_mode = #tpu.pipeline_mode<synchronous>, transform_indices = @transform_1, window_bounds = array<i64: 8, 128>}, {pipeline_mode = #tpu.pipeline_mode<synchronous>, transform_indices = @transform_2, window_bounds = array<i64: 128, 384>}, {pipeline_mode = #tpu.pipeline_mode<synchronous>, transform_indices = @transform_3, window_bounds = array<i64: 128, 384>}, {pipeline_mode = #tpu.pipeline_mode<synchronous>, transform_indices = @transform_4, window_bounds = array<i64: 1, 384>}, {pipeline_mode = #tpu.pipeline_mode<synchronous>, transform_indices = @transform_5, window_bounds = array<i64: 1, 384>}, {transform_indices = @transform_6, window_bounds = array<i64: 128, 128>}, {transform_indices = @transform_7, window_bounds = array<i64: 1, 128>}, {pipeline_mode = #tpu.pipeline_mode<synchronous>, transform_indices = @transform_8, window_bounds = array<i64: 1, 8, 128>}, {pipeline_mode = #tpu.pipeline_mode<synchronous>, transform_indices = @transform_9, window_bounds = array<i64: 8, 128>}]} {
    %c0_i32 = arith.constant 0 : i32
    %0 = arith.cmpi eq, %arg0, %c0_i32 : i32
    %1 = arith.extui %0 : i1 to i32
    %c0_i32_0 = arith.constant 0 : i32
    %2 = arith.cmpi ne, %1, %c0_i32_0 : i32
    scf.if %2 {
      %c0_20 = arith.constant 0 : index
      %c0_21 = arith.constant 0 : index
      %33 = vector.load %arg1[%c0_20, %c0_21] : memref<8x128xf32, #tpu.memory_space<vmem>>, vector<8x128xf32>
      %cst_22 = arith.constant 0.000000e+00 : f32
      %34 = vector.broadcast %cst_22 : f32 to vector<8x128xf32>
      %35 = arith.maximumf %33, %34 : vector<8x128xf32>
      %c0_23 = arith.constant 0 : index
      %c0_24 = arith.constant 0 : index
      %36 = vector.load %arg2[%c0_23, %c0_24] : memref<8x128xf32, #tpu.memory_space<vmem>>, vector<8x128xf32>
      %37 = arith.truncf %35 : vector<8x128xf32> to vector<8x128xbf16>
      %c0_25 = arith.constant 0 : index
      %c0_26 = arith.constant 0 : index
      %38 = vector.load %arg3[%c0_25, %c0_26] : memref<128x384xbf16, #tpu.memory_space<vmem>>, vector<128x384xbf16>
      %cst_27 = arith.constant dense<0.000000e+00> : vector<8x384xf32>
      %39 = tpu.matmul %37, %38, %cst_27 {dimension_numbers = #tpu.dot_dimension_numbers<[1], [0], [0], [1], [0, 0, 1, 1], [], []>} : vector<8x128xbf16>, vector<128x384xbf16>, vector<8x384xf32> -> vector<8x384xf32>
      %c0_28 = arith.constant 0 : index
      %c0_29 = arith.constant 0 : index
      %40 = vector.load %arg5[%c0_28, %c0_29] : memref<1x384xf32, #tpu.memory_space<vmem>>, vector<1x384xf32>
      %41 = vector.broadcast %40 : vector<1x384xf32> to vector<8x384xf32>
      %42 = arith.addf %39, %41 : vector<8x384xf32>
      %43 = arith.truncf %36 : vector<8x128xf32> to vector<8x128xbf16>
      %c0_30 = arith.constant 0 : index
      %c0_31 = arith.constant 0 : index
      %44 = vector.load %arg4[%c0_30, %c0_31] : memref<128x384xbf16, #tpu.memory_space<vmem>>, vector<128x384xbf16>
      %cst_32 = arith.constant dense<0.000000e+00> : vector<8x384xf32>
      %45 = tpu.matmul %43, %44, %cst_32 {dimension_numbers = #tpu.dot_dimension_numbers<[1], [0], [0], [1], [0, 0, 1, 1], [], []>} : vector<8x128xbf16>, vector<128x384xbf16>, vector<8x384xf32> -> vector<8x384xf32>
      %c0_33 = arith.constant 0 : index
      %c0_34 = arith.constant 0 : index
      %46 = vector.load %arg6[%c0_33, %c0_34] : memref<1x384xf32, #tpu.memory_space<vmem>>, vector<1x384xf32>
      %47 = vector.broadcast %46 : vector<1x384xf32> to vector<8x384xf32>
      %48 = arith.addf %45, %47 : vector<8x384xf32>
      %49 = vector.extract_strided_slice %42 {offsets = [0, 0], sizes = [8, 128], strides = [1, 1]} : vector<8x384xf32> to vector<8x128xf32>
      %50 = vector.extract_strided_slice %42 {offsets = [0, 128], sizes = [8, 128], strides = [1, 1]} : vector<8x384xf32> to vector<8x128xf32>
      %51 = vector.extract_strided_slice %42 {offsets = [0, 256], sizes = [8, 128], strides = [1, 1]} : vector<8x384xf32> to vector<8x128xf32>
      %52 = vector.extract_strided_slice %48 {offsets = [0, 0], sizes = [8, 128], strides = [1, 1]} : vector<8x384xf32> to vector<8x128xf32>
      %53 = vector.extract_strided_slice %48 {offsets = [0, 128], sizes = [8, 128], strides = [1, 1]} : vector<8x384xf32> to vector<8x128xf32>
      %54 = vector.extract_strided_slice %48 {offsets = [0, 256], sizes = [8, 128], strides = [1, 1]} : vector<8x384xf32> to vector<8x128xf32>
      %55 = arith.addf %49, %52 : vector<8x128xf32>
      %cst_35 = arith.constant 5.000000e-01 : f32
      %56 = vector.broadcast %cst_35 : f32 to vector<8x128xf32>
      %57 = arith.mulf %56, %55 : vector<8x128xf32>
      %58 = math.tanh %57 : vector<8x128xf32>
      %cst_36 = arith.constant 1.000000e+00 : f32
      %59 = vector.broadcast %cst_36 : f32 to vector<8x128xf32>
      %60 = arith.addf %58, %59 : vector<8x128xf32>
      %cst_37 = arith.constant 5.000000e-01 : f32
      %61 = vector.broadcast %cst_37 : f32 to vector<8x128xf32>
      %62 = arith.mulf %61, %60 : vector<8x128xf32>
      %63 = arith.addf %50, %53 : vector<8x128xf32>
      %cst_38 = arith.constant 5.000000e-01 : f32
      %64 = vector.broadcast %cst_38 : f32 to vector<8x128xf32>
      %65 = arith.mulf %64, %63 : vector<8x128xf32>
      %66 = math.tanh %65 : vector<8x128xf32>
      %cst_39 = arith.constant 1.000000e+00 : f32
      %67 = vector.broadcast %cst_39 : f32 to vector<8x128xf32>
      %68 = arith.addf %66, %67 : vector<8x128xf32>
      %cst_40 = arith.constant 5.000000e-01 : f32
      %69 = vector.broadcast %cst_40 : f32 to vector<8x128xf32>
      %70 = arith.mulf %69, %68 : vector<8x128xf32>
      %71 = arith.mulf %62, %54 : vector<8x128xf32>
      %72 = arith.addf %51, %71 : vector<8x128xf32>
      %73 = math.tanh %72 : vector<8x128xf32>
      %cst_41 = arith.constant 1.000000e+00 : f32
      %74 = vector.broadcast %cst_41 : f32 to vector<8x128xf32>
      %75 = arith.subf %74, %70 : vector<8x128xf32>
      %76 = arith.mulf %75, %73 : vector<8x128xf32>
      %77 = arith.mulf %70, %36 : vector<8x128xf32>
      %78 = arith.addf %76, %77 : vector<8x128xf32>
      %c0_42 = arith.constant 0 : index
      %c0_43 = arith.constant 0 : index
      %79 = vector.load %arg11[%c0_42, %c0_43] : memref<8x128xf32, #tpu.memory_space<vmem>>, vector<8x128xf32>
      tpu.vector_store %arg11[%c0_42, %c0_43], %78 {strides = array<i32>} : memref<8x128xf32, #tpu.memory_space<vmem>>, vector<8x128xf32>,
      %c0_44 = arith.constant 0 : index
      %c0_45 = arith.constant 0 : index
      %80 = vector.load %arg10[%c0_44, %c0_45] : memref<8x128xf32, #tpu.memory_space<vmem>>, vector<8x128xf32>
      tpu.vector_store %arg10[%c0_44, %c0_45], %78 {strides = array<i32>} : memref<8x128xf32, #tpu.memory_space<vmem>>, vector<8x128xf32>,
      %cst_46 = arith.constant -1.000000e+30 : f32
      %81 = vector.broadcast %cst_46 : f32 to vector<8x1xf32>
      %c0_47 = arith.constant 0 : index
      %c0_48 = arith.constant 0 : index
      %82 = vector.load %arg12[%c0_47, %c0_48] : memref<8x1xf32, #tpu.memory_space<vmem>>, vector<8x1xf32>
      tpu.vector_store %arg12[%c0_47, %c0_48], %81 {strides = array<i32>} : memref<8x1xf32, #tpu.memory_space<vmem>>, vector<8x1xf32>,
      %cst_49 = arith.constant 0.000000e+00 : f32
      %83 = vector.broadcast %cst_49 : f32 to vector<8x1xf32>
      %c0_50 = arith.constant 0 : index
      %c0_51 = arith.constant 0 : index
      %84 = vector.load %arg13[%c0_50, %c0_51] : memref<8x1xf32, #tpu.memory_space<vmem>>, vector<8x1xf32>
      tpu.vector_store %arg13[%c0_50, %c0_51], %83 {strides = array<i32>} : memref<8x1xf32, #tpu.memory_space<vmem>>, vector<8x1xf32>,
    } else {
    }
    %c0 = arith.constant 0 : index
    %c0_1 = arith.constant 0 : index
    %3 = vector.load %arg11[%c0, %c0_1] : memref<8x128xf32, #tpu.memory_space<vmem>>, vector<8x128xf32>
    %4 = arith.truncf %3 : vector<8x128xf32> to vector<8x128xbf16>
    %c0_2 = arith.constant 0 : index
    %c0_3 = arith.constant 0 : index
    %5 = vector.load %arg7[%c0_2, %c0_3] : memref<128x128xbf16, #tpu.memory_space<vmem>>, vector<128x128xbf16>
    %cst = arith.constant dense<0.000000e+00> : vector<8x128xf32>
    %6 = tpu.matmul %4, %5, %cst {dimension_numbers = #tpu.dot_dimension_numbers<[1], [0], [0], [1], [0, 0, 1, 1], [], []>} : vector<8x128xbf16>, vector<128x128xbf16>, vector<8x128xf32> -> vector<8x128xf32>
    %c0_4 = arith.constant 0 : index
    %c0_5 = arith.constant 0 : index
    %7 = vector.load %arg8[%c0_4, %c0_5] : memref<1x128xf32, #tpu.memory_space<vmem>>, vector<1x128xf32>
    %8 = vector.broadcast %7 : vector<1x128xf32> to vector<8x128xf32>
    %9 = arith.addf %6, %8 : vector<8x128xf32>
    %10 = arith.index_cast %arg0 : i32 to index
    %c0_6 = arith.constant 0 : index
    %c0_7 = arith.constant 0 : index
    %11 = vector.load %arg9[%10, %c0_6, %c0_7] : memref<1x8x128xf32, #tpu.memory_space<vmem>>, vector<1x8x128xf32>
    %12 = vector.shape_cast %11 : vector<1x8x128xf32> to vector<8x128xf32>
    %13 = vector.shape_cast %9 : vector<8x128xf32> to vector<1x8x128xf32>
    tpu.vector_store %arg9[%10, %c0_6, %c0_7], %13 {strides = array<i32>} : memref<1x8x128xf32, #tpu.memory_space<vmem>>, vector<1x8x128xf32>,
    %c0_8 = arith.constant 0 : index
    %c0_9 = arith.constant 0 : index
    %14 = vector.load %arg12[%c0_8, %c0_9] : memref<8x1xf32, #tpu.memory_space<vmem>>, vector<8x1xf32>
    %cst_10 = arith.constant dense<0xFF800000> : vector<8xf32>
    %15 = vector.multi_reduction <maximumf>, %9, %cst_10 [1] : vector<8x128xf32> to vector<8xf32>
    %16 = vector.shape_cast %15 : vector<8xf32> to vector<8x1xf32>
    %17 = arith.maximumf %14, %16 : vector<8x1xf32>
    %c0_11 = arith.constant 0 : index
    %c0_12 = arith.constant 0 : index
    %18 = vector.load %arg13[%c0_11, %c0_12] : memref<8x1xf32, #tpu.memory_space<vmem>>, vector<8x1xf32>
    %19 = arith.subf %14, %17 : vector<8x1xf32>
    %20 = math.exp %19 : vector<8x1xf32>
    %21 = arith.mulf %18, %20 : vector<8x1xf32>
    %22 = vector.broadcast %17 : vector<8x1xf32> to vector<8x128xf32>
    %23 = arith.subf %9, %22 : vector<8x128xf32>
    %24 = math.exp %23 : vector<8x128xf32>
    %cst_13 = arith.constant dense<0.000000e+00> : vector<8xf32>
    %25 = vector.multi_reduction <add>, %24, %cst_13 [1] : vector<8x128xf32> to vector<8xf32>
    %26 = vector.shape_cast %25 : vector<8xf32> to vector<8x1xf32>
    %27 = arith.addf %21, %26 : vector<8x1xf32>
    %c0_14 = arith.constant 0 : index
    %c0_15 = arith.constant 0 : index
    %28 = vector.load %arg13[%c0_14, %c0_15] : memref<8x1xf32, #tpu.memory_space<vmem>>, vector<8x1xf32>
    tpu.vector_store %arg13[%c0_14, %c0_15], %27 {strides = array<i32>} : memref<8x1xf32, #tpu.memory_space<vmem>>, vector<8x1xf32>,
    %c0_16 = arith.constant 0 : index
    %c0_17 = arith.constant 0 : index
    %29 = vector.load %arg12[%c0_16, %c0_17] : memref<8x1xf32, #tpu.memory_space<vmem>>, vector<8x1xf32>
    tpu.vector_store %arg12[%c0_16, %c0_17], %17 {strides = array<i32>} : memref<8x1xf32, #tpu.memory_space<vmem>>, vector<8x1xf32>,
    %c0_i32_18 = arith.constant 0 : i32
    %30 = arith.cmpi eq, %arg0, %c0_i32_18 : i32
    %31 = arith.extui %30 : i1 to i32
    %c0_i32_19 = arith.constant 0 : i32
    %32 = arith.cmpi ne, %31, %c0_i32_19 : i32
    scf.if %32 {
      %c0_20 = arith.constant 0 : index
      %c0_21 = arith.constant 0 : index
      %33 = vector.load %arg12[%c0_20, %c0_21] : memref<8x1xf32, #tpu.memory_space<vmem>>, vector<8x1xf32>
      %c0_22 = arith.constant 0 : index
      %c0_23 = arith.constant 0 : index
      %34 = vector.load %arg13[%c0_22, %c0_23] : memref<8x1xf32, #tpu.memory_space<vmem>>, vector<8x1xf32>
      %35 = math.log %34 : vector<8x1xf32>
      %36 = arith.addf %33, %35 : vector<8x1xf32>
      %c0_24 = arith.constant 0 : index
      %c0_25 = arith.constant 0 : index
      %c0_26 = arith.constant 0 : index
      %37 = vector.load %arg9[%c0_24, %c0_25, %c0_26] : memref<1x8x128xf32, #tpu.memory_space<vmem>>, vector<1x8x128xf32>
      %38 = vector.shape_cast %36 : vector<8x1xf32> to vector<1x8x1xf32>
      %39 = vector.broadcast %38 : vector<1x8x1xf32> to vector<1x8x128xf32>
      %40 = arith.subf %37, %39 : vector<1x8x128xf32>
      %c0_27 = arith.constant 0 : index
      %c0_28 = arith.constant 0 : index
      %c0_29 = arith.constant 0 : index
      %41 = vector.load %arg9[%c0_27, %c0_28, %c0_29] : memref<1x8x128xf32, #tpu.memory_space<vmem>>, vector<1x8x128xf32>
      tpu.vector_store %arg9[%c0_27, %c0_28, %c0_29], %40 {strides = array<i32>} : memref<1x8x128xf32, #tpu.memory_space<vmem>>, vector<1x8x128xf32>,
    } else {
    }
    return
  }
  func.func @transform_0(%arg0: i32) -> (i32, i32) {
    %c0_i32 = arith.constant 0 : i32
    %c0_i32_0 = arith.constant 0 : i32
    %c0_i32_1 = arith.constant 0 : i32
    return %c0_i32, %c0_i32_0 : i32, i32
  }
  func.func @transform_1(%arg0: i32) -> (i32, i32) {
    %c0_i32 = arith.constant 0 : i32
    %c0_i32_0 = arith.constant 0 : i32
    %c0_i32_1 = arith.constant 0 : i32
    return %c0_i32, %c0_i32_0 : i32, i32
  }
  func.func @transform_2(%arg0: i32) -> (i32, i32) {
    %c0_i32 = arith.constant 0 : i32
    %c0_i32_0 = arith.constant 0 : i32
    %c0_i32_1 = arith.constant 0 : i32
    return %c0_i32, %c0_i32_0 : i32, i32
  }
  func.func @transform_3(%arg0: i32) -> (i32, i32) {
    %c0_i32 = arith.constant 0 : i32
    %c0_i32_0 = arith.constant 0 : i32
    %c0_i32_1 = arith.constant 0 : i32
    return %c0_i32, %c0_i32_0 : i32, i32
  }
  func.func @transform_4(%arg0: i32) -> (i32, i32) {
    %c0_i32 = arith.constant 0 : i32
    %c0_i32_0 = arith.constant 0 : i32
    %c0_i32_1 = arith.constant 0 : i32
    return %c0_i32, %c0_i32_0 : i32, i32
  }
  func.func @transform_5(%arg0: i32) -> (i32, i32) {
    %c0_i32 = arith.constant 0 : i32
    %c0_i32_0 = arith.constant 0 : i32
    %c0_i32_1 = arith.constant 0 : i32
    return %c0_i32, %c0_i32_0 : i32, i32
  }
  func.func @transform_6(%arg0: i32) -> (i32, i32) {
    %c0_i32 = arith.constant 0 : i32
    %c0_i32_0 = arith.constant 0 : i32
    return %c0_i32, %arg0 : i32, i32
  }
  func.func @transform_7(%arg0: i32) -> (i32, i32) {
    %c0_i32 = arith.constant 0 : i32
    %c0_i32_0 = arith.constant 0 : i32
    return %c0_i32, %arg0 : i32, i32
  }
  func.func @transform_8(%arg0: i32) -> (i32, i32, i32) {
    %c0_i32 = arith.constant 0 : i32
    %c0_i32_0 = arith.constant 0 : i32
    %c0_i32_1 = arith.constant 0 : i32
    %c0_i32_2 = arith.constant 0 : i32
    return %c0_i32, %c0_i32_0, %c0_i32_1 : i32, i32, i32
  }
  func.func @transform_9(%arg0: i32) -> (i32, i32) {
    %c0_i32 = arith.constant 0 : i32
    %c0_i32_0 = arith.constant 0 : i32
    %c0_i32_1 = arith.constant 0 : i32
    return %c0_i32, %c0_i32_0 : i32, i32
  }
}

</mosaic_0001>

<llo_original>
// kernel: decoder_rnn_forward.1
$region0: #{decoder_rnn_forward.1}
  #allocation0 [shape = 'u32[]', space=smem, size = 0x4, offset = 0x4, fixed_abs, tag = 'smem constant byte address 0x4 - core index']
  #allocation1 [shape = 'u32[144,128]{1,0:T(1,128)}', space=vmem, size = 0x12000, scoped, tag = 'internal scratch']
  #allocation2 [shape = 'f32[8,128]{1,0:T(8,128)}', space=vmem, size = 0x1000, scoped, tag = 'scratch operand']
  #allocation3 [shape = 'f32[8,1]{1,0:T(8,128)}', space=vmem, size = 0x1000, scoped, tag = 'scratch operand']
  #allocation4 [shape = 'f32[8,1]{1,0:T(8,128)}', space=vmem, size = 0x1000, scoped, tag = 'scratch operand']
  %s0 = inlined_call_operand.vmem [shape: f32[8,128], index: 0, kind: input, shape index: {}]
  %s1 = inlined_call_operand.vmem [shape: f32[8,128], index: 1, kind: input, shape index: {}]
  %s2 = inlined_call_operand.vmem [shape: bf16[128,384], index: 2, kind: input, shape index: {}]
  %s3 = inlined_call_operand.hbm [shape: bf16[128,384], index: 3, kind: input, shape index: {}]
  %s4 = inlined_call_operand.vmem [shape: f32[1,384], index: 4, kind: input, shape index: {}]
  %s5 = inlined_call_operand.vmem [shape: f32[1,384], index: 5, kind: input, shape index: {}]
  %s6 = inlined_call_operand.hbm [shape: bf16[128,128], index: 6, kind: input, shape index: {}]
  %s7 = inlined_call_operand.vmem [shape: f32[1,128], index: 7, kind: input, shape index: {}]
  %s8 = inlined_call_operand.vmem [shape: f32[1,8,128], index: 8, kind: output, shape index: {0}]
  %s9 = inlined_call_operand.vmem [shape: f32[8,128], index: 9, kind: output, shape index: {1}]
  %10 = xla_tuple %s8, %s9
  %s11 = sld [smem:[#allocation0]]
  $region66: #{decoder_rnn_forward.1} parent=0
    _
  %s13 = ssub.s32 1, %s11
  %s14 = scalar_select 0, %s13, %s11
  $region1: #{decoder_rnn_forward.1} parent=0
    #allocation5 [shape = 'u8[98304]{0}', space=vmem, size = 0x18000, scoped, tag = 'input window, operand 3, single buffered']
    #allocation6 [shape = 's32[1]{0}', space=sflag, size = 0x4, scoped, tag = 'scoped memory for decoder_rnn_forward.1']
    #allocation7 [shape = 'u8[32768]{0}', space=vmem, size = 0x8000, scoped, tag = 'input window, operand 6, single buffered']
    #allocation8 [shape = 's32[1]{0}', space=sflag, size = 0x4, scoped, tag = 'scoped memory for decoder_rnn_forward.1']
    %15 = vsyncpa [#allocation6], 0
    %16 = vsyncpa [#allocation8], 0
    // Predicated region
    $region2: #{decoder_rnn_forward.1} parent=1 // pred_check
      _
    $region3: #{decoder_rnn_forward.1} parent=1 // pred_check_branch
      %18 = sbr.rel (0) target = $region5
    $region4: #{decoder_rnn_forward.1} parent=1 // pred_region
      _
    $region5: #{decoder_rnn_forward.1} parent=1 // pred_fallthru
      _
    // Predicated region
    $region6: #{decoder_rnn_forward.1} parent=1 // pred_check
      _
    $region7: #{decoder_rnn_forward.1} parent=1 // pred_check_branch
      %20 = sbr.rel (0) target = $region9
    $region8: #{decoder_rnn_forward.1} parent=1 // pred_region
      _
    $region9: #{decoder_rnn_forward.1} parent=1 // pred_fallthru
      _
    // Predicated region
    $region10: #{decoder_rnn_forward.1} parent=1 // pred_check
      _
    $region11: #{decoder_rnn_forward.1} parent=1 // pred_check_branch
      %22 = sbr.rel (0) target = $region13
    $region12: #{decoder_rnn_forward.1} parent=1 // pred_region
      _
    $region13: #{decoder_rnn_forward.1} parent=1 // pred_fallthru
      _
    // Predicated region
    $region14: #{decoder_rnn_forward.1} parent=1 // pred_check
      _
    $region15: #{decoder_rnn_forward.1} parent=1 // pred_check_branch
      %24 = sbr.rel (0) target = $region17
    $region16: #{decoder_rnn_forward.1} parent=1 // pred_region
      %s26 = ssub.s32 3072, 3072
      %27 = vsyncadd [#allocation6], %s26
      %s28 = sshll.u32 [#allocation5], 4
      %s29 = int_to_ptr.vmem [resolvable:$true] %s28
      %34 = dma.hbm_to_vmem [thread:$0]  %s3, 3072, %s29, [#allocation6], 192, 192, 12
    $region17: #{decoder_rnn_forward.1} parent=1 // pred_fallthru
      _
    // Predicated region
    $region18: #{decoder_rnn_forward.1} parent=1 // pred_check
      _
    $region19: #{decoder_rnn_forward.1} parent=1 // pred_check_branch
      %36 = sbr.rel (0) target = $region21
    $region20: #{decoder_rnn_forward.1} parent=1 // pred_region
      _
    $region21: #{decoder_rnn_forward.1} parent=1 // pred_fallthru
      _
    // Predicated region
    $region22: #{decoder_rnn_forward.1} parent=1 // pred_check
      _
    $region23: #{decoder_rnn_forward.1} parent=1 // pred_check_branch
      %38 = sbr.rel (0) target = $region25
    $region24: #{decoder_rnn_forward.1} parent=1 // pred_region
      _
    $region25: #{decoder_rnn_forward.1} parent=1 // pred_fallthru
      _
    // Predicated region
    $region26: #{decoder_rnn_forward.1} parent=1 // pred_check
      _
    $region27: #{decoder_rnn_forward.1} parent=1 // pred_check_branch
      %40 = sbr.rel (0) target = $region29
    $region28: #{decoder_rnn_forward.1} parent=1 // pred_region
      %s42 = ssub.s32 1024, 1024
      %43 = vsyncadd [#allocation8], %s42
      %s44 = sshll.u32 [#allocation7], 4
      %s45 = int_to_ptr.vmem [resolvable:$true] %s44
      %50 = dma.hbm_to_vmem [thread:$0]  %s6, 1024, %s45, [#allocation8], 64, 64, 4
    $region29: #{decoder_rnn_forward.1} parent=1 // pred_fallthru
      _
    // Predicated region
    $region30: #{decoder_rnn_forward.1} parent=1 // pred_check
      _
    $region31: #{decoder_rnn_forward.1} parent=1 // pred_check_branch
      %52 = sbr.rel (0) target = $region33
    $region32: #{decoder_rnn_forward.1} parent=1 // pred_region
      _
    $region33: #{decoder_rnn_forward.1} parent=1 // pred_fallthru
      _
    // Predicated region
    $region34: #{decoder_rnn_forward.1} parent=1 // pred_check
      _
    $region35: #{decoder_rnn_forward.1} parent=1 // pred_check_branch
      %54 = sbr.rel (0) target = $region37
    $region36: #{decoder_rnn_forward.1} parent=1 // pred_region
      %55 = dma.done [#allocation6], 3072
    $region37: #{decoder_rnn_forward.1} parent=1 // pred_fallthru
      _
    // Predicated region
    $region38: #{decoder_rnn_forward.1} parent=1 // pred_check
      _
    $region39: #{decoder_rnn_forward.1} parent=1 // pred_check_branch
      %57 = sbr.rel (0) target = $region41
    $region40: #{decoder_rnn_forward.1} parent=1 // pred_region
      %58 = dma.done [#allocation8], 1024
    $region41: #{decoder_rnn_forward.1} parent=1 // pred_fallthru
      _
    %p60 = scmp.eq.s32.totalorder 0, 0
    // Predicated region
    $region42: #{decoder_rnn_forward.1} parent=1 // pred_check
      %p61 = pneg %p60
    $region43: #{decoder_rnn_forward.1} parent=1 // pred_check_branch
      %63 = sbr.rel (%p61) target = $region45
    $region44: #{decoder_rnn_forward.1} parent=1 // pred_region
      %v64 = vld [vmem:[%s0] sm:$0xff]
      %v65 = vmax.f32 %v64, 0.0
      %v66 = vld [vmem:[%s1] sm:$0xff]
      %v67 = vpack.c.bf16 %v65, %v65
      %v68 = vld [vmem:[%s2] sm:$0xff]
      %v69 = vld [vmem:[%s2 + $0x8] sm:$0xf]
      %v70 = vld [vmem:[%s2 + $0xc] sm:$0xff]
      %v71 = vld [vmem:[%s2 + $0x14] sm:$0xf]
      %v72 = vld [vmem:[%s2 + $0x18] sm:$0xff]
      %v73 = vld [vmem:[%s2 + $0x20] sm:$0xf]
      %v74 = vld [vmem:[%s2 + $0x24] sm:$0xff]
      %v75 = vld [vmem:[%s2 + $0x2c] sm:$0xf]
      %v76 = vld [vmem:[%s2 + $0x30] sm:$0xff]
      %v77 = vld [vmem:[%s2 + $0x38] sm:$0xf]
      %v78 = vld [vmem:[%s2 + $0x3c] sm:$0xff]
      %v79 = vld [vmem:[%s2 + $0x44] sm:$0xf]
      %v80 = vld [vmem:[%s2 + $0x48] sm:$0xff]
      %v81 = vld [vmem:[%s2 + $0x50] sm:$0xf]
      %v82 = vld [vmem:[%s2 + $0x54] sm:$0xff]
      %v83 = vld [vmem:[%s2 + $0x5c] sm:$0xf]
      %v84 = vld [vmem:[%s2 + $0x60] sm:$0xff]
      %v85 = vld [vmem:[%s2 + $0x68] sm:$0xf]
      %v86 = vld [vmem:[%s2 + $0x6c] sm:$0xff]
      %v87 = vld [vmem:[%s2 + $0x74] sm:$0xf]
      %v88 = vld [vmem:[%s2 + $0x78] sm:$0xff]
      %v89 = vld [vmem:[%s2 + $0x80] sm:$0xf]
      %v90 = vld [vmem:[%s2 + $0x84] sm:$0xff]
      %v91 = vld [vmem:[%s2 + $0x8c] sm:$0xf]
      %v92 = vld [vmem:[%s2 + $0x90] sm:$0xff]
      %v93 = vld [vmem:[%s2 + $0x98] sm:$0xf]
      %v94 = vld [vmem:[%s2 + $0x9c] sm:$0xff]
      %v95 = vld [vmem:[%s2 + $0xa4] sm:$0xf]
      %v96 = vld [vmem:[%s2 + $0xa8] sm:$0xff]
      %v97 = vld [vmem:[%s2 + $0xb0] sm:$0xf]
      %v98 = vld [vmem:[%s2 + $0xb4] sm:$0xff]
      %v99 = vld [vmem:[%s2 + $0xbc] sm:$0xf]
      %v100 = vld [vmem:[%s4] sm:$0x7]
      %v102 = vlaneseq
      %v103 = vshrl.u32 %v102, 7
      %v104 = vsub.s32 0, %v103
      %v105 = vrot.slane %v100, %v104
      %v106 = vlaneseq
      %v107 = vshrl.u32 %v106, 7
      %v108 = vsub.s32 1, %v107
      %v109 = vrot.slane %v100, %v108
      %v110 = vlaneseq
      %v111 = vshrl.u32 %v110, 7
      %v112 = vsub.s32 2, %v111
      %v113 = vrot.slane %v100, %v112
      %v149 = vunpack.c.l.b16 %v68
      %v150 = vunpack.c.h.b16 %v68
      %v151 = vunpack.c.l.b16 %v69
      %v152 = vunpack.c.l.b16 %v70
      %v153 = vunpack.c.h.b16 %v70
      %v154 = vunpack.c.l.b16 %v71
      %v155 = vunpack.c.l.b16 %v72
      %v156 = vunpack.c.h.b16 %v72
      %v157 = vunpack.c.l.b16 %v73
      %v158 = vunpack.c.l.b16 %v74
      %v159 = vunpack.c.h.b16 %v74
      %v160 = vunpack.c.l.b16 %v75
      %v161 = vunpack.c.l.b16 %v76
      %v162 = vunpack.c.h.b16 %v76
      %v163 = vunpack.c.l.b16 %v77
      %v164 = vunpack.c.l.b16 %v78
      %v165 = vunpack.c.h.b16 %v78
      %v166 = vunpack.c.l.b16 %v79
      %v167 = vunpack.c.l.b16 %v80
      %v168 = vunpack.c.h.b16 %v80
      %v169 = vunpack.c.l.b16 %v81
      %v170 = vunpack.c.l.b16 %v82
      %v171 = vunpack.c.h.b16 %v82
      %v172 = vunpack.c.l.b16 %v83
      %v173 = vunpack.c.l.b16 %v84
      %v174 = vunpack.c.h.b16 %v84
      %v175 = vunpack.c.l.b16 %v85
      %v176 = vunpack.c.l.b16 %v86
      %v177 = vunpack.c.h.b16 %v86
      %v178 = vunpack.c.l.b16 %v87
      %v179 = vunpack.c.l.b16 %v88
      %v180 = vunpack.c.h.b16 %v88
      %v181 = vunpack.c.l.b16 %v89
      %v182 = vunpack.c.l.b16 %v90
      %v183 = vunpack.c.h.b16 %v90
      %v184 = vunpack.c.l.b16 %v91
      %v185 = vunpack.c.l.b16 %v92
      %v186 = vunpack.c.h.b16 %v92
      %v187 = vunpack.c.l.b16 %v93
      %v188 = vunpack.c.l.b16 %v94
      %v189 = vunpack.c.h.b16 %v94
      %v190 = vunpack.c.l.b16 %v95
      %v191 = vunpack.c.l.b16 %v96
      %v192 = vunpack.c.h.b16 %v96
      %v193 = vunpack.c.l.b16 %v97
      %v194 = vunpack.c.l.b16 %v98
      %v195 = vunpack.c.h.b16 %v98
      %v196 = vunpack.c.l.b16 %v99
      %v197 = vpack.c.b16 %v152, %v149
      %v198 = vpack.c.b16 %v153, %v150
      %v199 = vpack.c.b16 %v154, %v151
      %v200 = vpack.c.b16 %v158, %v155
      %v201 = vpack.c.b16 %v159, %v156
      %v202 = vpack.c.b16 %v160, %v157
      %v203 = vpack.c.b16 %v164, %v161
      %v204 = vpack.c.b16 %v165, %v162
      %v205 = vpack.c.b16 %v166, %v163
      %v206 = vpack.c.b16 %v170, %v167
      %v207 = vpack.c.b16 %v171, %v168
      %v208 = vpack.c.b16 %v172, %v169
      %v209 = vpack.c.b16 %v176, %v173
      %v210 = vpack.c.b16 %v177, %v174
      %v211 = vpack.c.b16 %v178, %v175
      %v212 = vpack.c.b16 %v182, %v179
      %v213 = vpack.c.b16 %v183, %v180
      %v214 = vpack.c.b16 %v184, %v181
      %v215 = vpack.c.b16 %v188, %v185
      %v216 = vpack.c.b16 %v189, %v186
      %v217 = vpack.c.b16 %v190, %v187
      %v218 = vpack.c.b16 %v194, %v191
      %v219 = vpack.c.b16 %v195, %v192
      %v220 = vpack.c.b16 %v196, %v193
      %245 = vmatprep.subr.bf16.mxu0 %v198
      %246 = vmatpush1.bf16.msra.mxu0 %v197
      %247 = vmatprep.subr.bf16.mxu0 %v201
      %248 = vmatpush1.bf16.msra.mxu0 %v200
      %249 = vmatprep.subr.bf16.mxu0 %v204
      %250 = vmatpush1.bf16.msra.mxu0 %v203
      %251 = vmatprep.subr.bf16.mxu0 %v207
      %252 = vmatpush1.bf16.msra.mxu0 %v206
      %253 = vmatprep.subr.bf16.mxu0 %v210
      %254 = vmatpush1.bf16.msra.mxu0 %v209
      %255 = vmatprep.subr.bf16.mxu0 %v213
      %256 = vmatpush1.bf16.msra.mxu0 %v212
      %257 = vmatprep.subr.bf16.mxu0 %v216
      %258 = vmatpush1.bf16.msra.mxu0 %v215
      %259 = vmatprep.subr.bf16.mxu0 %v219
      %260 = vmatpush1.bf16.msra.mxu0 %v218
      %261 = vmatprep.subr.bf16.mxu0 0
      %262 = vmatpush1.bf16.msra.mxu0 0
      %263 = vmatprep.subr.bf16.mxu0 0
      %264 = vmatpush1.bf16.msra.mxu0 0
      %265 = vmatprep.subr.bf16.mxu0 0
      %266 = vmatpush1.bf16.msra.mxu0 0
      %267 = vmatprep.subr.bf16.mxu0 0
      %268 = vmatpush1.bf16.msra.mxu0 0
      %269 = vmatprep.subr.bf16.mxu0 0
      %270 = vmatpush1.bf16.msra.mxu0 0
      %271 = vmatprep.subr.bf16.mxu0 0
      %272 = vmatpush1.bf16.msra.mxu0 0
      %273 = vmatprep.subr.bf16.mxu0 0
      %274 = vmatpush1.bf16.msra.mxu0 0
      %275 = vmatprep.subr.bf16.mxu0 0
      %276 = vmatpush1.bf16.msra.mxu0 0
      %277 = vmatprep.mubr.bf16.mxu0 0
      %278 = vmatmul.mubr.bf16.gmra.mrb[0].mxu0 %v67
      %v279 = vpop.f32.mrb[0].mxu0
      %v280 = vadd.f32 %v105, %v279
      %v281 = vpop.f32.mrb[0].mxu0
      %v282 = vadd.f32 %v109, %v281
      %v283 = vpop.f32.mrb[0].mxu0
      %v284 = vpop.f32.mrb[0].mxu0
      %285 = vdwg.mxu0
      %286 = vmatprep.subr.bf16.mxu0 0
      %287 = vmatpush1.bf16.msra.mxu0 %v199
      %288 = vmatprep.subr.bf16.mxu0 0
      %289 = vmatpush1.bf16.msra.mxu0 %v202
      %290 = vmatprep.subr.bf16.mxu0 0
      %291 = vmatpush1.bf16.msra.mxu0 %v205
      %292 = vmatprep.subr.bf16.mxu0 0
      %293 = vmatpush1.bf16.msra.mxu0 %v208
      %294 = vmatprep.subr.bf16.mxu0 0
      %295 = vmatpush1.bf16.msra.mxu0 %v211
      %296 = vmatprep.subr.bf16.mxu0 0
      %297 = vmatpush1.bf16.msra.mxu0 %v214
      %298 = vmatprep.subr.bf16.mxu0 0
      %299 = vmatpush1.bf16.msra.mxu0 %v217
      %300 = vmatprep.subr.bf16.mxu0 0
      %301 = vmatpush1.bf16.msra.mxu0 %v220
      %302 = vmatprep.subr.bf16.mxu0 0
      %303 = vmatpush1.bf16.msra.mxu0 0
      %304 = vmatprep.subr.bf16.mxu0 0
      %305 = vmatpush1.bf16.msra.mxu0 0
      %306 = vmatprep.subr.bf16.mxu0 0
      %307 = vmatpush1.bf16.msra.mxu0 0
      %308 = vmatprep.subr.bf16.mxu0 0
      %309 = vmatpush1.bf16.msra.mxu0 0
      %310 = vmatprep.subr.bf16.mxu0 0
      %311 = vmatpush1.bf16.msra.mxu0 0
      %312 = vmatprep.subr.bf16.mxu0 0
      %313 = vmatpush1.bf16.msra.mxu0 0
      %314 = vmatprep.subr.bf16.mxu0 0
      %315 = vmatpush1.bf16.msra.mxu0 0
      %316 = vmatprep.subr.bf16.mxu0 0
      %317 = vmatpush1.bf16.msra.mxu0 0
      %318 = vmatprep.mubr.bf16.mxu0 0
      %319 = vmatmul.mubr.bf16.gmra.mrb[0].mxu0 %v67
      %v320 = vpop.f32.mrb[0].mxu0
      %v321 = vadd.f32 %v113, %v320
      %v322 = vpop.f32.mrb[0].mxu0
      %v323 = vpop.f32.mrb[0].mxu0
      %v324 = vpop.f32.mrb[0].mxu0
      %325 = vdwg.mxu0
      %v326 = vpack.c.bf16 %v66, %v66
      %v327 = vld [vmem:[#allocation5] sm:$0xff]
      %v328 = vld [vmem:[#allocation5 + $0x8] sm:$0xf]
      %v329 = vld [vmem:[#allocation5 + $0xc] sm:$0xff]
      %v330 = vld [vmem:[#allocation5 + $0x14] sm:$0xf]
      %v331 = vld [vmem:[#allocation5 + $0x18] sm:$0xff]
      %v332 = vld [vmem:[#allocation5 + $0x20] sm:$0xf]
      %v333 = vld [vmem:[#allocation5 + $0x24] sm:$0xff]
      %v334 = vld [vmem:[#allocation5 + $0x2c] sm:$0xf]
      %v335 = vld [vmem:[#allocation5 + $0x30] sm:$0xff]
      %v336 = vld [vmem:[#allocation5 + $0x38] sm:$0xf]
      %v337 = vld [vmem:[#allocation5 + $0x3c] sm:$0xff]
      %v338 = vld [vmem:[#allocation5 + $0x44] sm:$0xf]
      %v339 = vld [vmem:[#allocation5 + $0x48] sm:$0xff]
      %v340 = vld [vmem:[#allocation5 + $0x50] sm:$0xf]
      %v341 = vld [vmem:[#allocation5 + $0x54] sm:$0xff]
      %v342 = vld [vmem:[#allocation5 + $0x5c] sm:$0xf]
      %v343 = vld [vmem:[#allocation5 + $0x60] sm:$0xff]
      %v344 = vld [vmem:[#allocation5 + $0x68] sm:$0xf]
      %v345 = vld [vmem:[#allocation5 + $0x6c] sm:$0xff]
      %v346 = vld [vmem:[#allocation5 + $0x74] sm:$0xf]
      %v347 = vld [vmem:[#allocation5 + $0x78] sm:$0xff]
      %v348 = vld [vmem:[#allocation5 + $0x80] sm:$0xf]
      %v349 = vld [vmem:[#allocation5 + $0x84] sm:$0xff]
      %v350 = vld [vmem:[#allocation5 + $0x8c] sm:$0xf]
      %v351 = vld [vmem:[#allocation5 + $0x90] sm:$0xff]
      %v352 = vld [vmem:[#allocation5 + $0x98] sm:$0xf]
      %v353 = vld [vmem:[#allocation5 + $0x9c] sm:$0xff]
      %v354 = vld [vmem:[#allocation5 + $0xa4] sm:$0xf]
      %v355 = vld [vmem:[#allocation5 + $0xa8] sm:$0xff]
      %v356 = vld [vmem:[#allocation5 + $0xb0] sm:$0xf]
      %v357 = vld [vmem:[#allocation5 + $0xb4] sm:$0xff]
      %v358 = vld [vmem:[#allocation5 + $0xbc] sm:$0xf]
      %v359 = vld [vmem:[%s5] sm:$0x7]
      %v361 = vlaneseq
      %v362 = vshrl.u32 %v361, 7
      %v363 = vsub.s32 0, %v362
      %v364 = vrot.slane %v359, %v363
      %v365 = vlaneseq
      %v366 = vshrl.u32 %v365, 7
      %v367 = vsub.s32 1, %v366
      %v368 = vrot.slane %v359, %v367
      %v369 = vlaneseq
      %v370 = vshrl.u32 %v369, 7
      %v371 = vsub.s32 2, %v370
      %v372 = vrot.slane %v359, %v371
      %v408 = vunpack.c.l.b16 %v327
      %v409 = vunpack.c.h.b16 %v327
      %v410 = vunpack.c.l.b16 %v328
      %v411 = vunpack.c.l.b16 %v329
      %v412 = vunpack.c.h.b16 %v329
      %v413 = vunpack.c.l.b16 %v330
      %v414 = vunpack.c.l.b16 %v331
      %v415 = vunpack.c.h.b16 %v331
      %v416 = vunpack.c.l.b16 %v332
      %v417 = vunpack.c.l.b16 %v333
      %v418 = vunpack.c.h.b16 %v333
      %v419 = vunpack.c.l.b16 %v334
      %v420 = vunpack.c.l.b16 %v335
      %v421 = vunpack.c.h.b16 %v335
      %v422 = vunpack.c.l.b16 %v336
      %v423 = vunpack.c.l.b16 %v337
      %v424 = vunpack.c.h.b16 %v337
      %v425 = vunpack.c.l.b16 %v338
      %v426 = vunpack.c.l.b16 %v339
      %v427 = vunpack.c.h.b16 %v339
      %v428 = vunpack.c.l.b16 %v340
      %v429 = vunpack.c.l.b16 %v341
      %v430 = vunpack.c.h.b16 %v341
      %v431 = vunpack.c.l.b16 %v342
      %v432 = vunpack.c.l.b16 %v343
      %v433 = vunpack.c.h.b16 %v343
      %v434 = vunpack.c.l.b16 %v344
      %v435 = vunpack.c.l.b16 %v345
      %v436 = vunpack.c.h.b16 %v345
      %v437 = vunpack.c.l.b16 %v346
      %v438 = vunpack.c.l.b16 %v347
      %v439 = vunpack.c.h.b16 %v347
      %v440 = vunpack.c.l.b16 %v348
      %v441 = vunpack.c.l.b16 %v349
      %v442 = vunpack.c.h.b16 %v349
      %v443 = vunpack.c.l.b16 %v350
      %v444 = vunpack.c.l.b16 %v351
      %v445 = vunpack.c.h.b16 %v351
      %v446 = vunpack.c.l.b16 %v352
      %v447 = vunpack.c.l.b16 %v353
      %v448 = vunpack.c.h.b16 %v353
      %v449 = vunpack.c.l.b16 %v354
      %v450 = vunpack.c.l.b16 %v355
      %v451 = vunpack.c.h.b16 %v355
      %v452 = vunpack.c.l.b16 %v356
      %v453 = vunpack.c.l.b16 %v357
      %v454 = vunpack.c.h.b16 %v357
      %v455 = vunpack.c.l.b16 %v358
      %v456 = vpack.c.b16 %v411, %v408
      %v457 = vpack.c.b16 %v412, %v409
      %v458 = vpack.c.b16 %v413, %v410
      %v459 = vpack.c.b16 %v417, %v414
      %v460 = vpack.c.b16 %v418, %v415
      %v461 = vpack.c.b16 %v419, %v416
      %v462 = vpack.c.b16 %v423, %v420
      %v463 = vpack.c.b16 %v424, %v421
      %v464 = vpack.c.b16 %v425, %v422
      %v465 = vpack.c.b16 %v429, %v426
      %v466 = vpack.c.b16 %v430, %v427
      %v467 = vpack.c.b16 %v431, %v428
      %v468 = vpack.c.b16 %v435, %v432
      %v469 = vpack.c.b16 %v436, %v433
      %v470 = vpack.c.b16 %v437, %v434
      %v471 = vpack.c.b16 %v441, %v438
      %v472 = vpack.c.b16 %v442, %v439
      %v473 = vpack.c.b16 %v443, %v440
      %v474 = vpack.c.b16 %v447, %v444
      %v475 = vpack.c.b16 %v448, %v445
      %v476 = vpack.c.b16 %v449, %v446
      %v477 = vpack.c.b16 %v453, %v450
      %v478 = vpack.c.b16 %v454, %v451
      %v479 = vpack.c.b16 %v455, %v452
      %504 = vmatprep.subr.bf16.mxu0 %v457
      %505 = vmatpush1.bf16.msra.mxu0 %v456
      %506 = vmatprep.subr.bf16.mxu0 %v460
      %507 = vmatpush1.bf16.msra.mxu0 %v459
      %508 = vmatprep.subr.bf16.mxu0 %v463
      %509 = vmatpush1.bf16.msra.mxu0 %v462
      %510 = vmatprep.subr.bf16.mxu0 %v466
      %511 = vmatpush1.bf16.msra.mxu0 %v465
      %512 = vmatprep.subr.bf16.mxu0 %v469
      %513 = vmatpush1.bf16.msra.mxu0 %v468
      %514 = vmatprep.subr.bf16.mxu0 %v472
      %515 = vmatpush1.bf16.msra.mxu0 %v471
      %516 = vmatprep.subr.bf16.mxu0 %v475
      %517 = vmatpush1.bf16.msra.mxu0 %v474
      %518 = vmatprep.subr.bf16.mxu0 %v478
      %519 = vmatpush1.bf16.msra.mxu0 %v477
      %520 = vmatprep.subr.bf16.mxu0 0
      %521 = vmatpush1.bf16.msra.mxu0 0
      %522 = vmatprep.subr.bf16.mxu0 0
      %523 = vmatpush1.bf16.msra.mxu0 0
      %524 = vmatprep.subr.bf16.mxu0 0
      %525 = vmatpush1.bf16.msra.mxu0 0
      %526 = vmatprep.subr.bf16.mxu0 0
      %527 = vmatpush1.bf16.msra.mxu0 0
      %528 = vmatprep.subr.bf16.mxu0 0
      %529 = vmatpush1.bf16.msra.mxu0 0
      %530 = vmatprep.subr.bf16.mxu0 0
      %531 = vmatpush1.bf16.msra.mxu0 0
      %532 = vmatprep.subr.bf16.mxu0 0
      %533 = vmatpush1.bf16.msra.mxu0 0
      %534 = vmatprep.subr.bf16.mxu0 0
      %535 = vmatpush1.bf16.msra.mxu0 0
      %536 = vmatprep.mubr.bf16.mxu0 0
      %537 = vmatmul.mubr.bf16.gmra.mrb[0].mxu0 %v326
      %v538 = vpop.f32.mrb[0].mxu0
      %v539 = vadd.f32 %v364, %v538
      %v540 = vpop.f32.mrb[0].mxu0
      %v541 = vadd.f32 %v368, %v540
      %v542 = vpop.f32.mrb[0].mxu0
      %v543 = vpop.f32.mrb[0].mxu0
      %544 = vdwg.mxu0
      %545 = vmatprep.subr.bf16.mxu0 0
      %546 = vmatpush1.bf16.msra.mxu0 %v458
      %547 = vmatprep.subr.bf16.mxu0 0
      %548 = vmatpush1.bf16.msra.mxu0 %v461
      %549 = vmatprep.subr.bf16.mxu0 0
      %550 = vmatpush1.bf16.msra.mxu0 %v464
      %551 = vmatprep.subr.bf16.mxu0 0
      %552 = vmatpush1.bf16.msra.mxu0 %v467
      %553 = vmatprep.subr.bf16.mxu0 0
      %554 = vmatpush1.bf16.msra.mxu0 %v470
      %555 = vmatprep.subr.bf16.mxu0 0
      %556 = vmatpush1.bf16.msra.mxu0 %v473
      %557 = vmatprep.subr.bf16.mxu0 0
      %558 = vmatpush1.bf16.msra.mxu0 %v476
      %559 = vmatprep.subr.bf16.mxu0 0
      %560 = vmatpush1.bf16.msra.mxu0 %v479
      %561 = vmatprep.subr.bf16.mxu0 0
      %562 = vmatpush1.bf16.msra.mxu0 0
      %563 = vmatprep.subr.bf16.mxu0 0
      %564 = vmatpush1.bf16.msra.mxu0 0
      %565 = vmatprep.subr.bf16.mxu0 0
      %566 = vmatpush1.bf16.msra.mxu0 0
      %567 = vmatprep.subr.bf16.mxu0 0
      %568 = vmatpush1.bf16.msra.mxu0 0
      %569 = vmatprep.subr.bf16.mxu0 0
      %570 = vmatpush1.bf16.msra.mxu0 0
      %571 = vmatprep.subr.bf16.mxu0 0
      %572 = vmatpush1.bf16.msra.mxu0 0
      %573 = vmatprep.subr.bf16.mxu0 0
      %574 = vmatpush1.bf16.msra.mxu0 0
      %575 = vmatprep.subr.bf16.mxu0 0
      %576 = vmatpush1.bf16.msra.mxu0 0
      %577 = vmatprep.mubr.bf16.mxu0 0
      %578 = vmatmul.mubr.bf16.gmra.mrb[0].mxu0 %v326
      %v579 = vpop.f32.mrb[0].mxu0
      %v580 = vadd.f32 %v372, %v579
      %v581 = vpop.f32.mrb[0].mxu0
      %v582 = vpop.f32.mrb[0].mxu0
      %v583 = vpop.f32.mrb[0].mxu0
      %584 = vdwg.mxu0
      %v585 = vadd.f32 %v280, %v539
      %v586 = vmul.f32 %v585, 0.5
      %v587 = vtanh.pop %v586
      %v588 = vadd.f32 %v587, 1.0
      %v589 = vmul.f32 %v588, 0.5
      %v590 = vadd.f32 %v282, %v541
      %v591 = vmul.f32 %v590, 0.5
      %v592 = vtanh.pop %v591
      %v593 = vadd.f32 %v592, 1.0
      %v594 = vmul.f32 %v593, 0.5
      %v595 = vmul.f32 %v589, %v580
      %v596 = vadd.f32 %v321, %v595
      %v597 = vtanh.pop %v596
      %v598 = vsub.f32 1.0, %v594
      %v599 = vmul.f32 %v598, %v597
      %v600 = vmul.f32 %v594, %v66
      %v601 = vadd.f32 %v599, %v600
      %602 = vst [vmem:[#allocation2] sm:$0xff] %v601
      %603 = vst [vmem:[%s9] sm:$0xff] %v601
      %vm604 = vcmask 7168
      %605 = vst.msk [vmem:[#allocation3] sm:$0xff] %vm604, -1e+30
      %606 = vst.msk [vmem:[#allocation4] sm:$0xff] %vm604, 0.0
    $region45: #{decoder_rnn_forward.1} parent=1 // pred_fallthru
      _
    %v607 = vld [vmem:[#allocation2] sm:$0xff]
    %v608 = vpack.c.bf16 %v607, %v607
    %v609 = vld [vmem:[#allocation7] sm:$0xf]
    %v610 = vld [vmem:[#allocation7 + $0x4] sm:$0xf]
    %v611 = vld [vmem:[#allocation7 + $0x8] sm:$0xf]
    %v612 = vld [vmem:[#allocation7 + $0xc] sm:$0xf]
    %v613 = vld [vmem:[#allocation7 + $0x10] sm:$0xf]
    %v614 = vld [vmem:[#allocation7 + $0x14] sm:$0xf]
    %v615 = vld [vmem:[#allocation7 + $0x18] sm:$0xf]
    %v616 = vld [vmem:[#allocation7 + $0x1c] sm:$0xf]
    %v617 = vld [vmem:[#allocation7 + $0x20] sm:$0xf]
    %v618 = vld [vmem:[#allocation7 + $0x24] sm:$0xf]
    %v619 = vld [vmem:[#allocation7 + $0x28] sm:$0xf]
    %v620 = vld [vmem:[#allocation7 + $0x2c] sm:$0xf]
    %v621 = vld [vmem:[#allocation7 + $0x30] sm:$0xf]
    %v622 = vld [vmem:[#allocation7 + $0x34] sm:$0xf]
    %v623 = vld [vmem:[#allocation7 + $0x38] sm:$0xf]
    %v624 = vld [vmem:[#allocation7 + $0x3c] sm:$0xf]
    %v625 = vld [vmem:[%s7] sm:$0x1]
    %v627 = vlaneseq
    %v628 = vshrl.u32 %v627, 7
    %v629 = vsub.s32 0, %v628
    %v630 = vrot.slane %v625, %v629
    %v648 = vunpack.c.l.b16 %v609
    %v649 = vunpack.c.l.b16 %v610
    %v650 = vunpack.c.l.b16 %v611
    %v651 = vunpack.c.l.b16 %v612
    %v652 = vunpack.c.l.b16 %v613
    %v653 = vunpack.c.l.b16 %v614
    %v654 = vunpack.c.l.b16 %v615
    %v655 = vunpack.c.l.b16 %v616
    %v656 = vunpack.c.l.b16 %v617
    %v657 = vunpack.c.l.b16 %v618
    %v658 = vunpack.c.l.b16 %v619
    %v659 = vunpack.c.l.b16 %v620
    %v660 = vunpack.c.l.b16 %v621
    %v661 = vunpack.c.l.b16 %v622
    %v662 = vunpack.c.l.b16 %v623
    %v663 = vunpack.c.l.b16 %v624
    %v664 = vpack.c.b16 %v649, %v648
    %v665 = vpack.c.b16 %v651, %v650
    %v666 = vpack.c.b16 %v653, %v652
    %v667 = vpack.c.b16 %v655, %v654
    %v668 = vpack.c.b16 %v657, %v656
    %v669 = vpack.c.b16 %v659, %v658
    %v670 = vpack.c.b16 %v661, %v660
    %v671 = vpack.c.b16 %v663, %v662
    %680 = vmatprep.subr.bf16.mxu0 0
    %681 = vmatpush1.bf16.msra.mxu0 %v664
    %682 = vmatprep.subr.bf16.mxu0 0
    %683 = vmatpush1.bf16.msra.mxu0 %v665
    %684 = vmatprep.subr.bf16.mxu0 0
    %685 = vmatpush1.bf16.msra.mxu0 %v666
    %686 = vmatprep.subr.bf16.mxu0 0
    %687 = vmatpush1.bf16.msra.mxu0 %v667
    %688 = vmatprep.subr.bf16.mxu0 0
    %689 = vmatpush1.bf16.msra.mxu0 %v668
    %690 = vmatprep.subr.bf16.mxu0 0
    %691 = vmatpush1.bf16.msra.mxu0 %v669
    %692 = vmatprep.subr.bf16.mxu0 0
    %693 = vmatpush1.bf16.msra.mxu0 %v670
    %694 = vmatprep.subr.bf16.mxu0 0
    %695 = vmatpush1.bf16.msra.mxu0 %v671
    %696 = vmatprep.subr.bf16.mxu0 0
    %697 = vmatpush1.bf16.msra.mxu0 0
    %698 = vmatprep.subr.bf16.mxu0 0
    %699 = vmatpush1.bf16.msra.mxu0 0
    %700 = vmatprep.subr.bf16.mxu0 0
    %701 = vmatpush1.bf16.msra.mxu0 0
    %702 = vmatprep.subr.bf16.mxu0 0
    %703 = vmatpush1.bf16.msra.mxu0 0
    %704 = vmatprep.subr.bf16.mxu0 0
    %705 = vmatpush1.bf16.msra.mxu0 0
    %706 = vmatprep.subr.bf16.mxu0 0
    %707 = vmatpush1.bf16.msra.mxu0 0
    %708 = vmatprep.subr.bf16.mxu0 0
    %709 = vmatpush1.bf16.msra.mxu0 0
    %710 = vmatprep.subr.bf16.mxu0 0
    %711 = vmatpush1.bf16.msra.mxu0 0
    %712 = vmatprep.mubr.bf16.mxu0 0
    %713 = vmatmul.mubr.bf16.gmra.mrb[0].mxu0 %v608
    %v714 = vpop.f32.mrb[0].mxu0
    %v715 = vadd.f32 %v630, %v714
    %v716 = vpop.f32.mrb[0].mxu0
    %v717 = vpop.f32.mrb[0].mxu0
    %v718 = vpop.f32.mrb[0].mxu0
    %719 = vdwg.mxu0
    %s720 = smul.u32 0, 8
    %s721 = scalar_lea.vmem %s8, %s720
    %722 = vst [vmem:[%s721] sm:$0xff] %v715
    %v723 = vld [vmem:[#allocation3] sm:$0xff]
    %724 = vmax.xlane.f32.xlu0 %v715
    %v725 = vpop.xlane.xlu0 %724
    %v726 = vmax.f32 %v723, %v725
    %v727 = vld [vmem:[#allocation4] sm:$0xff]
    %v728 = vsub.f32 %v723, %v726
    %v729 = vmul.f32 %v728, 1.442695
    %v730 = vpow.pop %v729
    %v731 = vmul.f32 %v727, %v730
    %733 = vset.pattern.permute.xlu0 0
    %734 = vperm.xlu0 %733, %v726
    %v735 = vpop.permute.xlu0 %734
    %v737 = vsub.f32 %v715, %v735
    %v738 = vmul.f32 %v737, 1.442695
    %v739 = vpow.pop %v738
    %740 = vadd.xlane.f32.xlu0 %v739
    %v741 = vpop.xlane.xlu0 %740
    %v742 = vadd.f32 %v731, %v741
    %vm743 = vcmask 7168
    %744 = vst.msk [vmem:[#allocation4] sm:$0xff] %vm743, %v742
    %745 = vst.msk [vmem:[#allocation3] sm:$0xff] %vm743, %v726
    // Predicated region
    $region46: #{decoder_rnn_forward.1} parent=1 // pred_check
      %p746 = pneg %p60
    $region47: #{decoder_rnn_forward.1} parent=1 // pred_check_branch
      %748 = sbr.rel (%p746) target = $region49
    $region48: #{decoder_rnn_forward.1} parent=1 // pred_region
      %v749 = vld [vmem:[#allocation3] sm:$0xff]
      %v750 = vld [vmem:[#allocation4] sm:$0xff]
      %v751 = vlog2.pop %v750
      %v752 = vmul.f32 %v751, 0.6931472
      %v753 = vadd.f32 %v749, %v752
      %v754 = vld [vmem:[%s8] sm:$0xff]
      %756 = vset.pattern.permute.xlu0 0
      %757 = vperm.xlu0 %756, %v753
      %v758 = vpop.permute.xlu0 %757
      %v760 = vsub.f32 %v754, %v758
      %761 = vst [vmem:[%s8] sm:$0xff] %v760
    $region49: #{decoder_rnn_forward.1} parent=1 // pred_fallthru
      _
    // Predicated region
    $region50: #{decoder_rnn_forward.1} parent=1 // pred_check
      _
    $region51: #{decoder_rnn_forward.1} parent=1 // pred_check_branch
      %763 = sbr.rel (0) target = $region53
    $region52: #{decoder_rnn_forward.1} parent=1 // pred_region
      _
    $region53: #{decoder_rnn_forward.1} parent=1 // pred_fallthru
      _
    // Predicated region
    $region54: #{decoder_rnn_forward.1} parent=1 // pred_check
      _
    $region55: #{decoder_rnn_forward.1} parent=1 // pred_check_branch
      %765 = sbr.rel (0) target = $region57
    $region56: #{decoder_rnn_forward.1} parent=1 // pred_region
      _
    $region57: #{decoder_rnn_forward.1} parent=1 // pred_fallthru
      _
    // Predicated region
    $region58: #{decoder_rnn_forward.1} parent=1 // pred_check
      _
    $region59: #{decoder_rnn_forward.1} parent=1 // pred_check_branch
      %767 = sbr.rel (0) target = $region61
    $region60: #{decoder_rnn_forward.1} parent=1 // pred_region
      _
    $region61: #{decoder_rnn_forward.1} parent=1 // pred_fallthru
      _
    // Predicated region
    $region62: #{decoder_rnn_forward.1} parent=1 // pred_check
      _
    $region63: #{decoder_rnn_forward.1} parent=1 // pred_check_branch
      %769 = sbr.rel (0) target = $region65
    $region64: #{decoder_rnn_forward.1} parent=1 // pred_region
      _
    $region65: #{decoder_rnn_forward.1} parent=1 // pred_fallthru
      _
    %770 = vsyncpa [#allocation6], 1
    %771 = vsyncpa [#allocation8], 1

</llo_original>
